<compile_context>
chip_gen: v5e
topology: v5e:2x2
jax: 0.10.0
libtpu: 0.0.40
codegen_flags: <defaults>
</compile_context>

<pallas_src>
import jax
import jax.numpy as jnp
from jax.experimental import pallas as pl
from jax.experimental.pallas import tpu as pltpu


def _round_up(x, m):
    return ((x + m - 1) // m) * m


def _pick_tiles(n):
    """(tm, tk, n_pad): row tile, contraction tile, padded node count.

    n_pad is a multiple of 256 so lanes are always 128-aligned and the row
    ("parallel") axis always has >= 2 tiles -> both v7x TensorCores get work.
    Large contraction tiles amortize the ~0.35us per-grid-step overhead on the
    HBM-bound adjacency stream.
    """
    n_pad = _round_up(n, 256)
    if n_pad >= 2048 and n_pad % 512 == 0:
        tm = 512
    elif n_pad >= 512:
        tm = 256
    else:
        tm = 128                      # n_pad == 256 -> two row tiles
    if n_pad >= 2048 and n_pad % 1024 == 0:
        tk = 1024
    elif n_pad % 512 == 0:
        tk = 512
    else:
        tk = 256
    return tm, tk, n_pad


def _make_kernel(tk, x_resident, fuse_linear):
    """Build the GCN kernel.

    tk          : contraction tile size (static)
    x_resident  : feature operand is fully VMEM-resident -> slice it per k step
    fuse_linear : kernel computes A@H and applies W^T + bias + relu as epilogue
                  (used when out_dim > in_dim); otherwise computes A@(HW) + b.
    """

    def _load_x(x_ref):
        if x_resident:
            start = pl.multiple_of(pl.program_id(1) * tk, tk)
            return x_ref[pl.ds(start, tk), :]
        return x_ref[...]

    if fuse_linear:
        def kernel(adj_ref, x_ref, wt_ref, b_ref, out_ref, acc_ref):
            # adj_ref : (tm, tk)            bf16 (exact 0/1)
            # x_ref   : (n_pad|tk, in_pad)  bf16 node features H
            # wt_ref  : (in_pad, out_pad)   f32  W^T (small epilogue, kept f32)
            # b_ref   : (1, out_pad)        f32
            # out_ref : (tm, out_pad)       f32
            # acc_ref : (tm, in_pad)        f32  aggregation accumulator
            k = pl.program_id(1)
            part = jnp.dot(adj_ref[...], _load_x(x_ref),
                           preferred_element_type=jnp.float32)

            @pl.when(k == 0)
            def _init():
                acc_ref[...] = part

            @pl.when(k > 0)
            def _acc():
                acc_ref[...] += part

            @pl.when(k == pl.num_programs(1) - 1)
            def _finalize():
                lin = jnp.dot(acc_ref[...], wt_ref[...],
                              preferred_element_type=jnp.float32)
                out_ref[...] = jnp.maximum(lin + b_ref[...], 0.0)

        return kernel

    def kernel(adj_ref, x_ref, b_ref, out_ref):
        # adj_ref : (tm, tk)             bf16 (exact 0/1)
        # x_ref   : (n_pad|tk, out_pad)  bf16 precomputed H @ W^T
        # b_ref   : (1, out_pad)         f32
        # out_ref : (tm, out_pad)        f32 -- doubles as the accumulator (its
        #           block index is constant across k, so it stays VMEM-resident)
        k = pl.program_id(1)
        part = jnp.dot(adj_ref[...], _load_x(x_ref),
                       preferred_element_type=jnp.float32)

        @pl.when(k == 0)
        def _init():
            out_ref[...] = part

        @pl.when(k > 0)
        def _acc():
            out_ref[...] += part

        @pl.when(k == pl.num_programs(1) - 1)
        def _finalize():
            out_ref[...] = jnp.maximum(out_ref[...] + b_ref[...], 0.0)

    return kernel


def _estimate_vmem(tm, tk, n_pad, feat_pad, out_pad, x_resident, fuse_linear):
    b = 2 * tm * tk * 2                                      # adj, 2-deep, bf16
    b += 2 * (n_pad if x_resident else tk) * feat_pad * 2    # feature operand
    b += 2 * tm * out_pad * 4                                # out tile
    b += 2 * out_pad * 4                                     # bias
    if fuse_linear:
        b += 2 * feat_pad * out_pad * 4                      # resident W^T
        b += tm * feat_pad * 4                               # acc scratch
    return b


def global_gcn_forward(adj, h, weight, bias):
    """relu( A @ H @ W^T + b ) with the contraction ordered by min(in, out).

    adj    : (N, N)            adj[v, u] = 1 iff edge u -> v (any float dtype;
                               pass bf16 to avoid an extra cast pass)
    h      : (N, in_dim)       node features
    weight : (out_dim, in_dim) nn.Linear weight
    bias   : (out_dim,)        nn.Linear bias
    """
    n, in_dim = h.shape
    out_dim = weight.shape[0]
    assert adj.shape == (n, n)

    tm, tk, n_pad = _pick_tiles(n)
    # Lane-dense (unmasked vst) output; 128 is enough while HBM-bound on A.
    out_pad = _round_up(out_dim, 128)
    in_pad = _round_up(in_dim, 128)

    fuse_linear = out_dim > in_dim     # contract against the smaller feature dim

    # Adjacency shipped as bf16 (0/1 values -> lossless, halves the dominant
    # HBM stream); cast/pad only when needed.
    # TODO(synk): store the adjacency as bf16 (or int8) upstream so this prologue
    # pass over the largest tensor disappears entirely.
    if adj.dtype != jnp.bfloat16:
        adj = adj.astype(jnp.bfloat16)
    if n_pad != n:
        adj = jnp.pad(adj, ((0, n_pad - n), (0, n_pad - n)))

    bias_pad = jnp.pad(bias.astype(jnp.float32),
                       (0, out_pad - out_dim)).reshape(1, out_pad)

    if fuse_linear:
        # Kernel: agg = A @ H (bf16 MXU); epilogue (tiny) in f32: relu(agg @ W^T + b)
        feat_pad = in_pad
        x = jnp.pad(h.astype(jnp.float32),
                    ((0, n_pad - n), (0, in_pad - in_dim))).astype(jnp.bfloat16)
        wt = jnp.pad(weight.astype(jnp.float32).T,
                     ((0, in_pad - in_dim), (0, out_pad - out_dim)))
        flops = 2 * n_pad * n_pad * in_pad + 2 * n_pad * in_pad * out_pad
    else:
        # Kernel: relu(A @ (H @ W^T) + b); HW precomputed once, shipped bf16 so the
        # big matmul runs at native bf16 MXU rate (f32 accumulation in-kernel).
        feat_pad = out_pad
        hw = jnp.einsum("ni,oi->no", h.astype(jnp.float32),
                        weight.astype(jnp.float32),
                        precision=jax.lax.Precision.HIGHEST)
        x = jnp.pad(hw, ((0, n_pad - n), (0, out_pad - out_dim))).astype(jnp.bfloat16)
        wt = None
        flops = 2 * n_pad * n_pad * out_pad

    # Keep the feature operand fully VMEM-resident (fetched from HBM once) when
    # small; otherwise stream (tk, feat_pad) blocks along the contraction axis.
    x_resident = (n_pad * feat_pad * 2) <= (4 << 20)
    x_spec = (pl.BlockSpec((n_pad, feat_pad), lambda i, k: (0, 0)) if x_resident
              else pl.BlockSpec((tk, feat_pad), lambda i, k: (k, 0)))

    in_specs = [pl.BlockSpec((tm, tk), lambda i, k: (i, k)), x_spec]
    operands = [adj, x]
    scratch = []
    if fuse_linear:
        in_specs.append(pl.BlockSpec((in_pad, out_pad), lambda i, k: (0, 0)))
        operands.append(wt)
        scratch.append(pltpu.VMEM((tm, in_pad), jnp.float32))
    in_specs.append(pl.BlockSpec((1, out_pad), lambda i, k: (0, 0)))
    operands.append(bias_pad)

    grid = (n_pad // tm, n_pad // tk)
    kernel = _make_kernel(tk, x_resident, fuse_linear)

    vmem_est = _estimate_vmem(tm, tk, n_pad, feat_pad, out_pad, x_resident,
                              fuse_linear)
    bytes_accessed = int(
        adj.size * 2
        + x.size * 2 * (1 if x_resident else grid[0])
        + bias_pad.size * 4
        + n_pad * out_pad * 4
        + (wt.size * 4 if fuse_linear else 0)
    )
    cost = pl.CostEstimate(flops=flops, transcendentals=0,
                           bytes_accessed=bytes_accessed)

    # TODO(synk): tile out_pad as a third grid axis if out_dim grows so large that
    # the resident operands blow the 64 MiB v7x VMEM budget.
    out = pl.pallas_call(
        kernel,
        out_shape=jax.ShapeDtypeStruct((n_pad, out_pad), jnp.float32),
        grid_spec=pltpu.PrefetchScalarGridSpec(
            num_scalar_prefetch=0,
            grid=grid,
            in_specs=in_specs,
            out_specs=pl.BlockSpec((tm, out_pad), lambda i, k: (i, 0)),
            scratch_shapes=scratch,
        ),
        compiler_params=pltpu.CompilerParams(
            dimension_semantics=("parallel", "arbitrary"),
            vmem_limit_bytes=int(min(max(2 * vmem_est, 32 << 20), 60 << 20)),
        ),
        cost_estimate=cost,
    )(*operands)

    return out[:n, :out_dim]


def _reference(adj, h, weight, bias):
    agg = jnp.dot(adj, h, precision=jax.lax.Precision.HIGHEST)
    lin = jnp.dot(agg, weight.T, precision=jax.lax.Precision.HIGHEST) + bias
    return jnp.maximum(lin, 0.0)


if __name__ == "__main__":
    key = jax.random.PRNGKey(0)
    k_adj, k_h, k_w, k_b, k_w2, k_b2 = jax.random.split(key, 6)

    num_nodes = 16
    in_dim = 32
    out_dim = 32

    # Deterministic random directed graph (+ self loops), dense adjacency.
    adj_f32 = jax.random.bernoulli(k_adj, p=0.3, shape=(num_nodes, num_nodes))
    adj_f32 = jnp.maximum(adj_f32.astype(jnp.float32),
                          jnp.eye(num_nodes, dtype=jnp.float32))
    adj_bf16 = adj_f32.astype(jnp.bfloat16)   # 0/1 -> exact in bf16

    h = jax.random.normal(k_h, (num_nodes, in_dim), dtype=jnp.float32)
    weight = jax.random.normal(k_w, (out_dim, in_dim), dtype=jnp.float32) * (1.0 / in_dim ** 0.5)
    bias = jax.random.normal(k_b, (out_dim,), dtype=jnp.float32) * 0.01

    # Path A: out_dim <= in_dim  ->  A @ (H W^T) in the kernel.
    out = jax.block_until_ready(global_gcn_forward(adj_bf16, h, weight, bias))
    ref = _reference(adj_f32, h, weight, bias)
    assert out.shape == (num_nodes, out_dim)
    # bf16 feature operand on the MXU (accumulation stays f32) -> relaxed tolerance.
    assert jnp.allclose(out, ref, atol=5e-2, rtol=5e-2)

    # Path B: out_dim > in_dim  ->  (A @ H) in the kernel + fused linear epilogue.
    out_dim2 = 64
    weight2 = jax.random.normal(k_w2, (out_dim2, in_dim), dtype=jnp.float32) * (1.0 / in_dim ** 0.5)
    bias2 = jax.random.normal(k_b2, (out_dim2,), dtype=jnp.float32) * 0.01
    out2 = jax.block_until_ready(global_gcn_forward(adj_bf16, h, weight2, bias2))
    ref2 = _reference(adj_f32, h, weight2, bias2)
    assert out2.shape == (num_nodes, out_dim2)
    assert jnp.allclose(out2, ref2, atol=5e-2, rtol=5e-2)

    print("KERNEL_OK")
</pallas_src>

<mosaic_0001>
module attributes {stable_mosaic.version = 11 : i64} {
  func.func @kernel(%arg0: i32, %arg1: i32, %arg2: memref<128x256xbf16, #tpu.memory_space<vmem>>, %arg3: memref<256x128xbf16, #tpu.memory_space<vmem>>, %arg4: memref<1x128xf32, #tpu.memory_space<vmem>>, %arg5: memref<128x128xf32, #tpu.memory_space<vmem>>) attributes {dimension_semantics = [#tpu.dimension_semantics<parallel>, #tpu.dimension_semantics<arbitrary>], iteration_bounds = array<i64: 2, 1>, scalar_prefetch = 0 : i64, scratch_operands = 0 : i64, tpu.core_type = #tpu.core_type<tc>, window_params = [{transform_indices = @transform_0, window_bounds = array<i64: 128, 256>}, {pipeline_mode = #tpu.pipeline_mode<synchronous>, transform_indices = @transform_1, window_bounds = array<i64: 256, 128>}, {pipeline_mode = #tpu.pipeline_mode<synchronous>, transform_indices = @transform_2, window_bounds = array<i64: 1, 128>}, {transform_indices = @transform_3, window_bounds = array<i64: 128, 128>}]} {
    %c0 = arith.constant 0 : index
    %c0_0 = arith.constant 0 : index
    %0 = vector.load %arg2[%c0, %c0_0] : memref<128x256xbf16, #tpu.memory_space<vmem>>, vector<128x256xbf16>
    %c256_i32 = arith.constant 256 : i32
    %1 = arith.muli %arg1, %c256_i32 : i32
    %2 = tpu.assume_multiple %1, 256 : i32
    %3 = arith.index_cast %2 : i32 to index
    %c0_1 = arith.constant 0 : index
    %4 = vector.load %arg3[%3, %c0_1] : memref<256x128xbf16, #tpu.memory_space<vmem>>, vector<256x128xbf16>
    %cst = arith.constant dense<0.000000e+00> : vector<128x128xf32>
    %5 = tpu.matmul %0, %4, %cst {dimension_numbers = #tpu.dot_dimension_numbers<[1], [0], [0], [1], [0, 0, 1, 1], [], []>} : vector<128x256xbf16>, vector<256x128xbf16>, vector<128x128xf32> -> vector<128x128xf32>
    %c0_i32 = arith.constant 0 : i32
    %6 = arith.cmpi eq, %arg1, %c0_i32 : i32
    %7 = arith.extui %6 : i1 to i32
    %c0_i32_2 = arith.constant 0 : i32
    %8 = arith.cmpi ne, %7, %c0_i32_2 : i32
    scf.if %8 {
      %c0_7 = arith.constant 0 : index
      %c0_8 = arith.constant 0 : index
      %15 = vector.load %arg5[%c0_7, %c0_8] : memref<128x128xf32, #tpu.memory_space<vmem>>, vector<128x128xf32>
      tpu.vector_store %arg5[%c0_7, %c0_8], %5 {strides = array<i32>} : memref<128x128xf32, #tpu.memory_space<vmem>>, vector<128x128xf32>,
    } else {
    }
    %c0_i32_3 = arith.constant 0 : i32
    %9 = arith.cmpi sgt, %arg1, %c0_i32_3 : i32
    %10 = arith.extui %9 : i1 to i32
    %c0_i32_4 = arith.constant 0 : i32
    %11 = arith.cmpi ne, %10, %c0_i32_4 : i32
    scf.if %11 {
      %c0_7 = arith.constant 0 : index
      %c0_8 = arith.constant 0 : index
      %15 = vector.load %arg5[%c0_7, %c0_8] : memref<128x128xf32, #tpu.memory_space<vmem>>, vector<128x128xf32>
      %16 = arith.addf %15, %5 : vector<128x128xf32>
      %c0_9 = arith.constant 0 : index
      %c0_10 = arith.constant 0 : index
      %17 = vector.load %arg5[%c0_9, %c0_10] : memref<128x128xf32, #tpu.memory_space<vmem>>, vector<128x128xf32>
      tpu.vector_store %arg5[%c0_9, %c0_10], %16 {strides = array<i32>} : memref<128x128xf32, #tpu.memory_space<vmem>>, vector<128x128xf32>,
    } else {
    }
    %c0_i32_5 = arith.constant 0 : i32
    %12 = arith.cmpi eq, %arg1, %c0_i32_5 : i32
    %13 = arith.extui %12 : i1 to i32
    %c0_i32_6 = arith.constant 0 : i32
    %14 = arith.cmpi ne, %13, %c0_i32_6 : i32
    scf.if %14 {
      %c0_7 = arith.constant 0 : index
      %c0_8 = arith.constant 0 : index
      %15 = vector.load %arg5[%c0_7, %c0_8] : memref<128x128xf32, #tpu.memory_space<vmem>>, vector<128x128xf32>
      %c0_9 = arith.constant 0 : index
      %c0_10 = arith.constant 0 : index
      %16 = vector.load %arg4[%c0_9, %c0_10] : memref<1x128xf32, #tpu.memory_space<vmem>>, vector<1x128xf32>
      %17 = vector.broadcast %16 : vector<1x128xf32> to vector<128x128xf32>
      %18 = arith.addf %15, %17 : vector<128x128xf32>
      %cst_11 = arith.constant 0.000000e+00 : f32
      %19 = vector.broadcast %cst_11 : f32 to vector<128x128xf32>
      %20 = arith.maximumf %18, %19 : vector<128x128xf32>
      %c0_12 = arith.constant 0 : index
      %c0_13 = arith.constant 0 : index
      %21 = vector.load %arg5[%c0_12, %c0_13] : memref<128x128xf32, #tpu.memory_space<vmem>>, vector<128x128xf32>
      tpu.vector_store %arg5[%c0_12, %c0_13], %20 {strides = array<i32>} : memref<128x128xf32, #tpu.memory_space<vmem>>, vector<128x128xf32>,
    } else {
    }
    return
  }
  func.func @transform_0(%arg0: i32, %arg1: i32) -> (i32, i32) {
    %c0_i32 = arith.constant 0 : i32
    return %arg0, %arg1 : i32, i32
  }
  func.func @transform_1(%arg0: i32, %arg1: i32) -> (i32, i32) {
    %c0_i32 = arith.constant 0 : i32
    %c0_i32_0 = arith.constant 0 : i32
    %c0_i32_1 = arith.constant 0 : i32
    return %c0_i32, %c0_i32_0 : i32, i32
  }
  func.func @transform_2(%arg0: i32, %arg1: i32) -> (i32, i32) {
    %c0_i32 = arith.constant 0 : i32
    %c0_i32_0 = arith.constant 0 : i32
    %c0_i32_1 = arith.constant 0 : i32
    return %c0_i32, %c0_i32_0 : i32, i32
  }
  func.func @transform_3(%arg0: i32, %arg1: i32) -> (i32, i32) {
    %c0_i32 = arith.constant 0 : i32
    %c0_i32_0 = arith.constant 0 : i32
    return %arg0, %c0_i32 : i32, i32
  }
}

</mosaic_0001>

<llo_original>
// kernel: tpu_custom_call.1
$region0: #{tpu_custom_call.1}
  #allocation0 [shape = 'u32[]', space=smem, size = 0x4, offset = 0x4, fixed_abs, tag = 'smem constant byte address 0x4 - core index']
  #allocation1 [shape = 'u32[72,128]{1,0:T(1,128)}', space=vmem, size = 0x9000, scoped, tag = 'internal scratch']
  %s0 = inlined_call_operand.hbm [shape: bf16[256,256], index: 0, kind: input, shape index: {}]
  %s1 = inlined_call_operand.hbm [shape: bf16[256,128], index: 1, kind: input, shape index: {}]
  %s2 = inlined_call_operand.vmem [shape: f32[1,128], index: 2, kind: input, shape index: {}]
  %s3 = inlined_call_operand.hbm [shape: f32[256,128], index: 3, kind: output, shape index: {}]
  %s4 = sld [smem:[#allocation0]]
  $region65: #{tpu_custom_call.1} parent=0
    _
  %s6 = ssub.s32 1, %s4
  %s7 = scalar_select 0, %s6, %s4
  $region1: #{tpu_custom_call.1} parent=0
    #allocation2 [shape = 'u8[131072]{0}', space=vmem, size = 0x20000, scoped, tag = 'input window, operand 0']
    #allocation3 [shape = 's32[2]{0}', space=sflag, size = 0x8, scoped, tag = 'scoped memory for tpu_custom_call.1']
    #allocation4 [shape = 's32[2]{0}', space=sflag, size = 0x8, scoped, tag = 'scoped memory for tpu_custom_call.1']
    #allocation5 [shape = 'u8[65536]{0}', space=vmem, size = 0x10000, scoped, tag = 'input window, operand 1, single buffered']
    #allocation6 [shape = 's32[1]{0}', space=sflag, size = 0x4, scoped, tag = 'scoped memory for tpu_custom_call.1']
    #allocation7 [shape = 'u8[131072]{0}', space=vmem, size = 0x20000, scoped, tag = 'output window, operand 0']
    %8 = vsyncpa [#allocation3], 0
    %s9 = scalar_lea.sflag [#allocation3], 1
    %10 = vsyncpa %s9, 0
    %11 = vsyncpa [#allocation6], 0
    %12 = vsyncpa [#allocation4], 0
    %s13 = scalar_lea.sflag [#allocation4], 1
    %14 = vsyncpa %s13, 0
    loop: start=0, step=1, limit=4
    $region2: #{tpu_custom_call.1} parent=1 // loop_pre_header
      _
    $region3: #{tpu_custom_call.1} parent=1 // loop_header
      %s16 = sphi 0, %s20
      %p17 = scmp.ge.s32.totalorder %s16, 4
      %s23 = sphi 0, %s35
      %s24 = sphi 0, %s31
      %s25 = sphi 0, %s23
      %s26 = sphi 0, %s24
      %s27 = sphi 0, %s25
      %s28 = sphi 0, %s26
      %s40 = sphi 0, %s42
      %s43 = sphi 0, %s40
      %s44 = sphi 0, %s43
      %s60 = sphi 0, %s44
      %s64 = sphi 0, %s64
      %s66 = sphi 0, %s64
      %s67 = sphi 0, %s66
      %s81 = sphi 0, %s67
      %s85 = sphi 0, %s85
      %s87 = sphi 0, %s85
      %s88 = sphi 0, %s87
      %s102 = sphi 0, %s88
      %s108 = sphi 0, %s110
      %s111 = sphi 0, %s108
      %s112 = sphi 0, %s111
      %s128 = sphi 0, %s112
    $region4: #{tpu_custom_call.1} parent=1 // loop_header_branch
      %19 = sbr.rel (%p17) target = $region8
    $region5: #{tpu_custom_call.1} parent=1 // loop_body
      %s21 = ssub.s32 %s16, 1
      %s22 = ssub.s32 %s16, 2
      %s29 = sadd.s32 1, %s24
      %p30 = scmp.ge.s32.totalorder %s29, 1
      %s31 = scalar_select %p30, 0, %s29
      %s32 = sadd.s32 1, %s23
      %s33 = scalar_select %p30, %s32, %s23
      %p34 = scmp.ge.s32.totalorder %s33, 2
      %s35 = scalar_select %p34, 0, %s33
      %s36 = ssub.s32 %s23, %s35
      %s37 = ssub.s32 %s24, %s31
      %s38 = sor.u32 %s36, %s37
      %p39 = scmp.eq.s32.totalorder %s38, 0
      %s41 = sadd.s32 %s40, 1
      %s42 = scalar_select %p39, %s40, %s41
      %p45 = pneg %p39
      %p46 = scmp.eq.s32.totalorder %s16, 1
      %p47 = por %p45, %p46
      %p48 = scmp.ne.s32.totalorder %s40, %s43
      %p49 = scmp.eq.s32.totalorder %s16, 0
      %p50 = por %p48, %p49
      %p51 = scmp.ne.s32.totalorder %s40, %s43
      %p52 = scmp.eq.s32.totalorder %s21, 1
      %p53 = por %p51, %p52
      %p54 = scmp.ne.s32.totalorder %s43, %s44
      %p55 = scmp.eq.s32.totalorder %s21, 0
      %p56 = por %p54, %p55
      %p57 = scmp.ne.s32.totalorder %s43, %s44
      %p58 = scmp.eq.s32.totalorder %s22, 1
      %p59 = por %p57, %p58
      %p61 = scmp.ne.s32.totalorder %s44, %s60
      %p62 = scmp.eq.s32.totalorder %s22, 0
      %p63 = por %p61, %p62
      %s65 = sadd.s32 %s64, 1
      %p68 = scmp.eq.s32.totalorder %s16, 1
      %p69 = scmp.ne.s32.totalorder %s64, %s66
      %p70 = scmp.eq.s32.totalorder %s16, 0
      %p71 = por %p69, %p70
      %p72 = scmp.ne.s32.totalorder %s64, %s66
      %p73 = scmp.eq.s32.totalorder %s21, 1
      %p74 = por %p72, %p73
      %p75 = scmp.ne.s32.totalorder %s66, %s67
      %p76 = scmp.eq.s32.totalorder %s21, 0
      %p77 = por %p75, %p76
      %p78 = scmp.ne.s32.totalorder %s66, %s67
      %p79 = scmp.eq.s32.totalorder %s22, 1
      %p80 = por %p78, %p79
      %p82 = scmp.ne.s32.totalorder %s67, %s81
      %p83 = scmp.eq.s32.totalorder %s22, 0
      %p84 = por %p82, %p83
      %s86 = sadd.s32 %s85, 1
      %p89 = scmp.eq.s32.totalorder %s16, 1
      %p90 = scmp.ne.s32.totalorder %s85, %s87
      %p91 = scmp.eq.s32.totalorder %s16, 0
      %p92 = por %p90, %p91
      %p93 = scmp.ne.s32.totalorder %s85, %s87
      %p94 = scmp.eq.s32.totalorder %s21, 1
      %p95 = por %p93, %p94
      %p96 = scmp.ne.s32.totalorder %s87, %s88
      %p97 = scmp.eq.s32.totalorder %s21, 0
      %p98 = por %p96, %p97
      %p99 = scmp.ne.s32.totalorder %s87, %s88
      %p100 = scmp.eq.s32.totalorder %s22, 1
      %p101 = por %p99, %p100
      %p103 = scmp.ne.s32.totalorder %s88, %s102
      %p104 = scmp.eq.s32.totalorder %s22, 0
      %p105 = por %p103, %p104
      %s106 = ssub.s32 %s23, %s35
      %p107 = scmp.eq.s32.totalorder %s106, 0
      %s109 = sadd.s32 %s108, 1
      %s110 = scalar_select %p107, %s108, %s109
      %p113 = pneg %p107
      %p114 = scmp.eq.s32.totalorder %s16, 1
      %p115 = por %p113, %p114
      %p116 = scmp.ne.s32.totalorder %s108, %s111
      %p117 = scmp.eq.s32.totalorder %s16, 0
      %p118 = por %p116, %p117
      %p119 = scmp.ne.s32.totalorder %s108, %s111
      %p120 = scmp.eq.s32.totalorder %s21, 1
      %p121 = por %p119, %p120
      %p122 = scmp.ne.s32.totalorder %s111, %s112
      %p123 = scmp.eq.s32.totalorder %s21, 0
      %p124 = por %p122, %p123
      %p125 = scmp.ne.s32.totalorder %s111, %s112
      %p126 = scmp.eq.s32.totalorder %s22, 1
      %p127 = por %p125, %p126
      %p129 = scmp.ne.s32.totalorder %s112, %s128
      %p130 = scmp.eq.s32.totalorder %s22, 0
      %p131 = por %p129, %p130
      %p132 = scmp.le.s32.totalorder 1, %s16
      %p133 = scmp.lt.s32.totalorder %s16, 3
      %p134 = pnand %p132, %p133
      %p135 = pneg %p134
      // Predicated region
      $region9: #{tpu_custom_call.1} parent=5 // pred_check
        _
      $region10: #{tpu_custom_call.1} parent=5 // pred_check_branch
        %137 = sbr.rel (%p134) target = $region12
      $region11: #{tpu_custom_call.1} parent=5 // pred_region
        %s138 = ssub.s32 %s16, 1
        // Predicated region
        $region13: #{tpu_custom_call.1} parent=11 // pred_check
          %p139 = pneg %p77
        $region14: #{tpu_custom_call.1} parent=11 // pred_check_branch
          %141 = sbr.rel (%p139) target = $region16
        $region15: #{tpu_custom_call.1} parent=11 // pred_region
          %143 = vsyncadd [#allocation6], 0
          %s144 = sshll.u32 %s1, 4
          %s145 = int_to_ptr.hbm [resolvable:$true] %s144
          %s146 = sshll.u32 [#allocation5], 4
          %s147 = int_to_ptr.vmem [resolvable:$true] %s146
          %152 = dma.hbm_to_vmem [thread:$0]  %s145, 2048, %s147, [#allocation6], 64, 64, 4
        $region16: #{tpu_custom_call.1} parent=11 // pred_fallthru
          _
        // Predicated region
        $region17: #{tpu_custom_call.1} parent=11 // pred_check
          %p153 = pneg %p98
        $region18: #{tpu_custom_call.1} parent=11 // pred_check_branch
          %155 = sbr.rel (%p153) target = $region20
        $region19: #{tpu_custom_call.1} parent=11 // pred_region
          _
        $region20: #{tpu_custom_call.1} parent=11 // pred_fallthru
          _
      $region12: #{tpu_custom_call.1} parent=5 // pred_fallthru
        _
      %p156 = scmp.lt.s32.totalorder %s16, 2
      // Predicated region
      $region21: #{tpu_custom_call.1} parent=5 // pred_check
        %p157 = pneg %p156
      $region22: #{tpu_custom_call.1} parent=5 // pred_check_branch
        %159 = sbr.rel (%p157) target = $region24
      $region23: #{tpu_custom_call.1} parent=5 // pred_region
        // Predicated region
        $region25: #{tpu_custom_call.1} parent=23 // pred_check
          %p160 = pneg %p50
        $region26: #{tpu_custom_call.1} parent=23 // pred_check_branch
          %162 = sbr.rel (%p160) target = $region28
        $region27: #{tpu_custom_call.1} parent=23 // pred_region
          %s163 = sand.u32 %s40, 1
          %s164 = scalar_lea.sflag [#allocation3], %s163
          %s165 = sand.u32 %s40, 1
          %s166 = smul.addr %s165, 128
          %s167 = scalar_lea.vmem [#allocation2], %s166
          %s168 = smul.u32 16, %s23
          %s169 = smul.u32 2, %s24
          %171 = vsyncadd %s164, 0
          %s172 = smul.addr %s168, 2
          %s173 = sadd.s32 %s169, %s172
          %s174 = smul.addr %s173, 4
          %s175 = scalar_lea.hbm %s0, %s174
          %s176 = sshll.u32 %s175, 4
          %s177 = int_to_ptr.hbm [resolvable:$true] %s176
          %s178 = sshll.u32 %s167, 4
          %s179 = int_to_ptr.vmem [resolvable:$true] %s178
          %184 = dma.hbm_to_vmem [thread:$0]  %s177, 2048, %s179, %s164, 128, 128, 8
        $region28: #{tpu_custom_call.1} parent=23 // pred_fallthru
          _
      $region24: #{tpu_custom_call.1} parent=5 // pred_fallthru
        _
      %p185 = scmp.le.s32.totalorder 1, %s16
      %p186 = scmp.lt.s32.totalorder %s16, 3
      %p187 = pnand %p185, %p186
      %p188 = pneg %p187
      // Predicated region
      $region29: #{tpu_custom_call.1} parent=5 // pred_check
        _
      $region30: #{tpu_custom_call.1} parent=5 // pred_check_branch
        %190 = sbr.rel (%p187) target = $region32
      $region31: #{tpu_custom_call.1} parent=5 // pred_region
        %s191 = ssub.s32 %s16, 1
        %s192 = sand.u32 %s43, 1
        %s193 = scalar_lea.sflag [#allocation3], %s192
        %s194 = sand.u32 %s43, 1
        %s195 = smul.addr %s194, 128
        %s196 = scalar_lea.vmem [#allocation2], %s195
        // Predicated region
        $region33: #{tpu_custom_call.1} parent=31 // pred_check
          %p197 = pneg %p56
        $region34: #{tpu_custom_call.1} parent=31 // pred_check_branch
          %199 = sbr.rel (%p197) target = $region36
        $region35: #{tpu_custom_call.1} parent=31 // pred_region
          %201 = dma.done %s193, 2048
        $region36: #{tpu_custom_call.1} parent=31 // pred_fallthru
          _
        // Predicated region
        $region37: #{tpu_custom_call.1} parent=31 // pred_check
          %p202 = pneg %p77
        $region38: #{tpu_custom_call.1} parent=31 // pred_check_branch
          %204 = sbr.rel (%p202) target = $region40
        $region39: #{tpu_custom_call.1} parent=31 // pred_region
          %206 = dma.done [#allocation6], 2048
        $region40: #{tpu_custom_call.1} parent=31 // pred_fallthru
          _
        %s207 = sand.u32 %s43, 1
        %s208 = scalar_lea.sflag [#allocation3], %s207
        %s209 = sand.u32 %s43, 1
        %s210 = smul.addr %s209, 128
        %s211 = scalar_lea.vmem [#allocation2], %s210
        %p212 = pneg %p56
        %p213 = pneg %p53
        %p214 = pneg %p77
        %p215 = pneg %p74
        %p216 = pneg %p98
        %p217 = pneg %p95
        %p218 = pneg %p124
        %p219 = pneg %p121
        %s220 = sand.u32 %s111, 1
        %s221 = scalar_lea.sflag [#allocation4], %s220
        %s222 = sand.u32 %s111, 1
        %s223 = smul.addr %s222, 128
        %s224 = scalar_lea.vmem [#allocation7], %s223
        %s225 = smul.u32 16, %s25
        %s226 = smul.u32 2, %s26
        %s227 = smul.u32 16, %s25
        %v228 = vld [vmem:[%s196] sm:$0xff]
        %v229 = vld [vmem:[%s196 + $0x8] sm:$0xff]
        %v230 = vld [vmem:[%s196 + $0x10] sm:$0xff]
        %v231 = vld [vmem:[%s196 + $0x18] sm:$0xff]
        %v232 = vld [vmem:[%s196 + $0x20] sm:$0xff]
        %v233 = vld [vmem:[%s196 + $0x28] sm:$0xff]
        %v234 = vld [vmem:[%s196 + $0x30] sm:$0xff]
        %v235 = vld [vmem:[%s196 + $0x38] sm:$0xff]
        %v236 = vld [vmem:[%s196 + $0x40] sm:$0xff]
        %v237 = vld [vmem:[%s196 + $0x48] sm:$0xff]
        %v238 = vld [vmem:[%s196 + $0x50] sm:$0xff]
        %v239 = vld [vmem:[%s196 + $0x58] sm:$0xff]
        %v240 = vld [vmem:[%s196 + $0x60] sm:$0xff]
        %v241 = vld [vmem:[%s196 + $0x68] sm:$0xff]
        %v242 = vld [vmem:[%s196 + $0x70] sm:$0xff]
        %v243 = vld [vmem:[%s196 + $0x78] sm:$0xff]
        %s244 = smul.u32 %s26, 256
        %s245 = sshra.s32 %s244, 3
        %s246 = sand.u32 %s244, 7
        %s247 = smul.addr %s245, 4
        %s248 = scalar_lea.vmem [#allocation5], %s247
        %v249 = vld [vmem:[%s248] sm:$0xf]
        %v250 = vld [vmem:[%s248 + $0x4] sm:$0xf]
        %v251 = vld [vmem:[%s248 + $0x8] sm:$0xf]
        %v252 = vld [vmem:[%s248 + $0xc] sm:$0xf]
        %v253 = vld [vmem:[%s248 + $0x10] sm:$0xf]
        %v254 = vld [vmem:[%s248 + $0x14] sm:$0xf]
        %v255 = vld [vmem:[%s248 + $0x18] sm:$0xf]
        %v256 = vld [vmem:[%s248 + $0x1c] sm:$0xf]
        %v257 = vld [vmem:[%s248 + $0x20] sm:$0xf]
        %v258 = vld [vmem:[%s248 + $0x24] sm:$0xf]
        %v259 = vld [vmem:[%s248 + $0x28] sm:$0xf]
        %v260 = vld [vmem:[%s248 + $0x2c] sm:$0xf]
        %v261 = vld [vmem:[%s248 + $0x30] sm:$0xf]
        %v262 = vld [vmem:[%s248 + $0x34] sm:$0xf]
        %v263 = vld [vmem:[%s248 + $0x38] sm:$0xf]
        %v264 = vld [vmem:[%s248 + $0x3c] sm:$0xf]
        %v265 = vld [vmem:[%s248 + $0x40] sm:$0xf]
        %v266 = vld [vmem:[%s248 + $0x44] sm:$0xf]
        %v267 = vld [vmem:[%s248 + $0x48] sm:$0xf]
        %v268 = vld [vmem:[%s248 + $0x4c] sm:$0xf]
        %v269 = vld [vmem:[%s248 + $0x50] sm:$0xf]
        %v270 = vld [vmem:[%s248 + $0x54] sm:$0xf]
        %v271 = vld [vmem:[%s248 + $0x58] sm:$0xf]
        %v272 = vld [vmem:[%s248 + $0x5c] sm:$0xf]
        %v273 = vld [vmem:[%s248 + $0x60] sm:$0xf]
        %v274 = vld [vmem:[%s248 + $0x64] sm:$0xf]
        %v275 = vld [vmem:[%s248 + $0x68] sm:$0xf]
        %v276 = vld [vmem:[%s248 + $0x6c] sm:$0xf]
        %v277 = vld [vmem:[%s248 + $0x70] sm:$0xf]
        %v278 = vld [vmem:[%s248 + $0x74] sm:$0xf]
        %v279 = vld [vmem:[%s248 + $0x78] sm:$0xf]
        %v280 = vld [vmem:[%s248 + $0x7c] sm:$0xf]
        %v297 = vunpack.c.l.b16 %v228
        %v298 = vunpack.c.h.b16 %v228
        %v299 = vunpack.c.l.b16 %v229
        %v300 = vunpack.c.h.b16 %v229
        %v301 = vunpack.c.l.b16 %v230
        %v302 = vunpack.c.h.b16 %v230
        %v303 = vunpack.c.l.b16 %v231
        %v304 = vunpack.c.h.b16 %v231
        %v305 = vunpack.c.l.b16 %v232
        %v306 = vunpack.c.h.b16 %v232
        %v307 = vunpack.c.l.b16 %v233
        %v308 = vunpack.c.h.b16 %v233
        %v309 = vunpack.c.l.b16 %v234
        %v310 = vunpack.c.h.b16 %v234
        %v311 = vunpack.c.l.b16 %v235
        %v312 = vunpack.c.h.b16 %v235
        %v313 = vunpack.c.l.b16 %v236
        %v314 = vunpack.c.h.b16 %v236
        %v315 = vunpack.c.l.b16 %v237
        %v316 = vunpack.c.h.b16 %v237
        %v317 = vunpack.c.l.b16 %v238
        %v318 = vunpack.c.h.b16 %v238
        %v319 = vunpack.c.l.b16 %v239
        %v320 = vunpack.c.h.b16 %v239
        %v321 = vunpack.c.l.b16 %v240
        %v322 = vunpack.c.h.b16 %v240
        %v323 = vunpack.c.l.b16 %v241
        %v324 = vunpack.c.h.b16 %v241
        %v325 = vunpack.c.l.b16 %v242
        %v326 = vunpack.c.h.b16 %v242
        %v327 = vunpack.c.l.b16 %v243
        %v328 = vunpack.c.h.b16 %v243
        %v329 = vpack.c.b16 %v299, %v297
        %v330 = vpack.c.b16 %v300, %v298
        %v331 = vpack.c.b16 %v303, %v301
        %v332 = vpack.c.b16 %v304, %v302
        %v333 = vpack.c.b16 %v307, %v305
        %v334 = vpack.c.b16 %v308, %v306
        %v335 = vpack.c.b16 %v311, %v309
        %v336 = vpack.c.b16 %v312, %v310
        %v337 = vpack.c.b16 %v315, %v313
        %v338 = vpack.c.b16 %v316, %v314
        %v339 = vpack.c.b16 %v319, %v317
        %v340 = vpack.c.b16 %v320, %v318
        %v341 = vpack.c.b16 %v323, %v321
        %v342 = vpack.c.b16 %v324, %v322
        %v343 = vpack.c.b16 %v327, %v325
        %v344 = vpack.c.b16 %v328, %v326
        %v393 = vunpack.c.l.b16 %v249
        %v394 = vunpack.c.l.b16 %v250
        %v395 = vunpack.c.l.b16 %v251
        %v396 = vunpack.c.l.b16 %v252
        %v397 = vunpack.c.l.b16 %v253
        %v398 = vunpack.c.l.b16 %v254
        %v399 = vunpack.c.l.b16 %v255
        %v400 = vunpack.c.l.b16 %v256
        %v401 = vunpack.c.l.b16 %v257
        %v402 = vunpack.c.l.b16 %v258
        %v403 = vunpack.c.l.b16 %v259
        %v404 = vunpack.c.l.b16 %v260
        %v405 = vunpack.c.l.b16 %v261
        %v406 = vunpack.c.l.b16 %v262
        %v407 = vunpack.c.l.b16 %v263
        %v408 = vunpack.c.l.b16 %v264
        %v409 = vunpack.c.l.b16 %v265
        %v410 = vunpack.c.l.b16 %v266
        %v411 = vunpack.c.l.b16 %v267
        %v412 = vunpack.c.l.b16 %v268
        %v413 = vunpack.c.l.b16 %v269
        %v414 = vunpack.c.l.b16 %v270
        %v415 = vunpack.c.l.b16 %v271
        %v416 = vunpack.c.l.b16 %v272
        %v417 = vunpack.c.l.b16 %v273
        %v418 = vunpack.c.l.b16 %v274
        %v419 = vunpack.c.l.b16 %v275
        %v420 = vunpack.c.l.b16 %v276
        %v421 = vunpack.c.l.b16 %v277
        %v422 = vunpack.c.l.b16 %v278
        %v423 = vunpack.c.l.b16 %v279
        %v424 = vunpack.c.l.b16 %v280
        %v425 = vpack.c.b16 %v394, %v393
        %v426 = vpack.c.b16 %v396, %v395
        %v427 = vpack.c.b16 %v398, %v397
        %v428 = vpack.c.b16 %v400, %v399
        %v429 = vpack.c.b16 %v402, %v401
        %v430 = vpack.c.b16 %v404, %v403
        %v431 = vpack.c.b16 %v406, %v405
        %v432 = vpack.c.b16 %v408, %v407
        %v433 = vpack.c.b16 %v410, %v409
        %v434 = vpack.c.b16 %v412, %v411
        %v435 = vpack.c.b16 %v414, %v413
        %v436 = vpack.c.b16 %v416, %v415
        %v437 = vpack.c.b16 %v418, %v417
        %v438 = vpack.c.b16 %v420, %v419
        %v439 = vpack.c.b16 %v422, %v421
        %v440 = vpack.c.b16 %v424, %v423
        %457 = vmatpush.bf16.msra.mxu0 %v432
        %458 = vmatpush.bf16.msra.mxu0 %v431
        %459 = vmatpush.bf16.msra.mxu0 %v430
        %460 = vmatpush.bf16.msra.mxu0 %v429
        %461 = vmatpush.bf16.msra.mxu0 %v428
        %462 = vmatpush.bf16.msra.mxu0 %v427
        %463 = vmatpush.bf16.msra.mxu0 %v426
        %464 = vmatpush.bf16.msra.mxu0 %v425
        %465 = vmatmul.bf16.gmra.mxu0 %v329
        %v466 = vpop.f32.mrf.mxu0
        %v467 = vadd.f32 0.0, %v466
        %v468 = vpop.f32.mrf.mxu0
        %v469 = vadd.f32 0.0, %v468
        %470 = vmatmul.bf16.gmra.mxu0 %v331
        %v471 = vpop.f32.mrf.mxu0
        %v472 = vadd.f32 0.0, %v471
        %v473 = vpop.f32.mrf.mxu0
        %v474 = vadd.f32 0.0, %v473
        %475 = vmatmul.bf16.gmra.mxu0 %v333
        %v476 = vpop.f32.mrf.mxu0
        %v477 = vadd.f32 0.0, %v476
        %v478 = vpop.f32.mrf.mxu0
        %v479 = vadd.f32 0.0, %v478
        %480 = vmatmul.bf16.gmra.mxu0 %v335
        %v481 = vpop.f32.mrf.mxu0
        %v482 = vadd.f32 0.0, %v481
        %v483 = vpop.f32.mrf.mxu0
        %v484 = vadd.f32 0.0, %v483
        %485 = vmatmul.bf16.gmra.mxu0 %v337
        %v486 = vpop.f32.mrf.mxu0
        %v487 = vadd.f32 0.0, %v486
        %v488 = vpop.f32.mrf.mxu0
        %v489 = vadd.f32 0.0, %v488
        %490 = vmatmul.bf16.gmra.mxu0 %v339
        %v491 = vpop.f32.mrf.mxu0
        %v492 = vadd.f32 0.0, %v491
        %v493 = vpop.f32.mrf.mxu0
        %v494 = vadd.f32 0.0, %v493
        %495 = vmatmul.bf16.gmra.mxu0 %v341
        %v496 = vpop.f32.mrf.mxu0
        %v497 = vadd.f32 0.0, %v496
        %v498 = vpop.f32.mrf.mxu0
        %v499 = vadd.f32 0.0, %v498
        %500 = vmatmul.bf16.gmra.mxu0 %v343
        %v501 = vpop.f32.mrf.mxu0
        %v502 = vadd.f32 0.0, %v501
        %v503 = vpop.f32.mrf.mxu0
        %v504 = vadd.f32 0.0, %v503
        %505 = vdwg.mxu0
        %506 = vmatpush.bf16.msra.mxu0 %v440
        %507 = vmatpush.bf16.msra.mxu0 %v439
        %508 = vmatpush.bf16.msra.mxu0 %v438
        %509 = vmatpush.bf16.msra.mxu0 %v437
        %510 = vmatpush.bf16.msra.mxu0 %v436
        %511 = vmatpush.bf16.msra.mxu0 %v435
        %512 = vmatpush.bf16.msra.mxu0 %v434
        %513 = vmatpush.bf16.msra.mxu0 %v433
        %514 = vmatmul.bf16.gmra.mxu0 %v330
        %v515 = vpop.f32.mrf.mxu0
        %v516 = vadd.f32 %v467, %v515
        %v517 = vpop.f32.mrf.mxu0
        %v518 = vadd.f32 %v469, %v517
        %519 = vmatmul.bf16.gmra.mxu0 %v332
        %v520 = vpop.f32.mrf.mxu0
        %v521 = vadd.f32 %v472, %v520
        %v522 = vpop.f32.mrf.mxu0
        %v523 = vadd.f32 %v474, %v522
        %524 = vmatmul.bf16.gmra.mxu0 %v334
        %v525 = vpop.f32.mrf.mxu0
        %v526 = vadd.f32 %v477, %v525
        %v527 = vpop.f32.mrf.mxu0
        %v528 = vadd.f32 %v479, %v527
        %529 = vmatmul.bf16.gmra.mxu0 %v336
        %v530 = vpop.f32.mrf.mxu0
        %v531 = vadd.f32 %v482, %v530
        %v532 = vpop.f32.mrf.mxu0
        %v533 = vadd.f32 %v484, %v532
        %534 = vmatmul.bf16.gmra.mxu0 %v338
        %v535 = vpop.f32.mrf.mxu0
        %v536 = vadd.f32 %v487, %v535
        %v537 = vpop.f32.mrf.mxu0
        %v538 = vadd.f32 %v489, %v537
        %539 = vmatmul.bf16.gmra.mxu0 %v340
        %v540 = vpop.f32.mrf.mxu0
        %v541 = vadd.f32 %v492, %v540
        %v542 = vpop.f32.mrf.mxu0
        %v543 = vadd.f32 %v494, %v542
        %544 = vmatmul.bf16.gmra.mxu0 %v342
        %v545 = vpop.f32.mrf.mxu0
        %v546 = vadd.f32 %v497, %v545
        %v547 = vpop.f32.mrf.mxu0
        %v548 = vadd.f32 %v499, %v547
        %549 = vmatmul.bf16.gmra.mxu0 %v344
        %v550 = vpop.f32.mrf.mxu0
        %v551 = vadd.f32 %v502, %v550
        %v552 = vpop.f32.mrf.mxu0
        %v553 = vadd.f32 %v504, %v552
        %554 = vdwg.mxu0
        %p555 = scmp.eq.s32.totalorder %s26, 0
        // Predicated region
        $region41: #{tpu_custom_call.1} parent=31 // pred_check
          %p556 = pneg %p555
        $region42: #{tpu_custom_call.1} parent=31 // pred_check_branch
          %558 = sbr.rel (%p556) target = $region44
        $region43: #{tpu_custom_call.1} parent=31 // pred_region
          %559 = vst [vmem:[%s224] sm:$0xff] %v516
          %560 = vst [vmem:[%s224 + $0x8] sm:$0xff] %v518
          %561 = vst [vmem:[%s224 + $0x10] sm:$0xff] %v521
          %562 = vst [vmem:[%s224 + $0x18] sm:$0xff] %v523
          %563 = vst [vmem:[%s224 + $0x20] sm:$0xff] %v526
          %564 = vst [vmem:[%s224 + $0x28] sm:$0xff] %v528
          %565 = vst [vmem:[%s224 + $0x30] sm:$0xff] %v531
          %566 = vst [vmem:[%s224 + $0x38] sm:$0xff] %v533
          %567 = vst [vmem:[%s224 + $0x40] sm:$0xff] %v536
          %568 = vst [vmem:[%s224 + $0x48] sm:$0xff] %v538
          %569 = vst [vmem:[%s224 + $0x50] sm:$0xff] %v541
          %570 = vst [vmem:[%s224 + $0x58] sm:$0xff] %v543
          %571 = vst [vmem:[%s224 + $0x60] sm:$0xff] %v546
          %572 = vst [vmem:[%s224 + $0x68] sm:$0xff] %v548
          %573 = vst [vmem:[%s224 + $0x70] sm:$0xff] %v551
          %574 = vst [vmem:[%s224 + $0x78] sm:$0xff] %v553
        $region44: #{tpu_custom_call.1} parent=31 // pred_fallthru
          _
        %p575 = scmp.gt.s32.totalorder %s26, 0
        // Predicated region
        $region45: #{tpu_custom_call.1} parent=31 // pred_check
          %p576 = pneg %p575
        $region46: #{tpu_custom_call.1} parent=31 // pred_check_branch
          %578 = sbr.rel (%p576) target = $region48
        $region47: #{tpu_custom_call.1} parent=31 // pred_region
          %v579 = vld [vmem:[%s224] sm:$0xff]
          %v580 = vld [vmem:[%s224 + $0x8] sm:$0xff]
          %v581 = vld [vmem:[%s224 + $0x10] sm:$0xff]
          %v582 = vld [vmem:[%s224 + $0x18] sm:$0xff]
          %v583 = vld [vmem:[%s224 + $0x20] sm:$0xff]
          %v584 = vld [vmem:[%s224 + $0x28] sm:$0xff]
          %v585 = vld [vmem:[%s224 + $0x30] sm:$0xff]
          %v586 = vld [vmem:[%s224 + $0x38] sm:$0xff]
          %v587 = vld [vmem:[%s224 + $0x40] sm:$0xff]
          %v588 = vld [vmem:[%s224 + $0x48] sm:$0xff]
          %v589 = vld [vmem:[%s224 + $0x50] sm:$0xff]
          %v590 = vld [vmem:[%s224 + $0x58] sm:$0xff]
          %v591 = vld [vmem:[%s224 + $0x60] sm:$0xff]
          %v592 = vld [vmem:[%s224 + $0x68] sm:$0xff]
          %v593 = vld [vmem:[%s224 + $0x70] sm:$0xff]
          %v594 = vld [vmem:[%s224 + $0x78] sm:$0xff]
          %v595 = vadd.f32 %v579, %v516
          %v596 = vadd.f32 %v580, %v518
          %v597 = vadd.f32 %v581, %v521
          %v598 = vadd.f32 %v582, %v523
          %v599 = vadd.f32 %v583, %v526
          %v600 = vadd.f32 %v584, %v528
          %v601 = vadd.f32 %v585, %v531
          %v602 = vadd.f32 %v586, %v533
          %v603 = vadd.f32 %v587, %v536
          %v604 = vadd.f32 %v588, %v538
          %v605 = vadd.f32 %v589, %v541
          %v606 = vadd.f32 %v590, %v543
          %v607 = vadd.f32 %v591, %v546
          %v608 = vadd.f32 %v592, %v548
          %v609 = vadd.f32 %v593, %v551
          %v610 = vadd.f32 %v594, %v553
          %611 = vst [vmem:[%s224] sm:$0xff] %v595
          %612 = vst [vmem:[%s224 + $0x8] sm:$0xff] %v596
          %613 = vst [vmem:[%s224 + $0x10] sm:$0xff] %v597
          %614 = vst [vmem:[%s224 + $0x18] sm:$0xff] %v598
          %615 = vst [vmem:[%s224 + $0x20] sm:$0xff] %v599
          %616 = vst [vmem:[%s224 + $0x28] sm:$0xff] %v600
          %617 = vst [vmem:[%s224 + $0x30] sm:$0xff] %v601
          %618 = vst [vmem:[%s224 + $0x38] sm:$0xff] %v602
          %619 = vst [vmem:[%s224 + $0x40] sm:$0xff] %v603
          %620 = vst [vmem:[%s224 + $0x48] sm:$0xff] %v604
          %621 = vst [vmem:[%s224 + $0x50] sm:$0xff] %v605
          %622 = vst [vmem:[%s224 + $0x58] sm:$0xff] %v606
          %623 = vst [vmem:[%s224 + $0x60] sm:$0xff] %v607
          %624 = vst [vmem:[%s224 + $0x68] sm:$0xff] %v608
          %625 = vst [vmem:[%s224 + $0x70] sm:$0xff] %v609
          %626 = vst [vmem:[%s224 + $0x78] sm:$0xff] %v610
        $region48: #{tpu_custom_call.1} parent=31 // pred_fallthru
          _
        // Predicated region
        $region49: #{tpu_custom_call.1} parent=31 // pred_check
          %p627 = pneg %p555
        $region50: #{tpu_custom_call.1} parent=31 // pred_check_branch
          %629 = sbr.rel (%p627) target = $region52
        $region51: #{tpu_custom_call.1} parent=31 // pred_region
          %v630 = vld [vmem:[%s224] sm:$0xff]
          %v631 = vld [vmem:[%s224 + $0x8] sm:$0xff]
          %v632 = vld [vmem:[%s224 + $0x10] sm:$0xff]
          %v633 = vld [vmem:[%s224 + $0x18] sm:$0xff]
          %v634 = vld [vmem:[%s224 + $0x20] sm:$0xff]
          %v635 = vld [vmem:[%s224 + $0x28] sm:$0xff]
          %v636 = vld [vmem:[%s224 + $0x30] sm:$0xff]
          %v637 = vld [vmem:[%s224 + $0x38] sm:$0xff]
          %v638 = vld [vmem:[%s224 + $0x40] sm:$0xff]
          %v639 = vld [vmem:[%s224 + $0x48] sm:$0xff]
          %v640 = vld [vmem:[%s224 + $0x50] sm:$0xff]
          %v641 = vld [vmem:[%s224 + $0x58] sm:$0xff]
          %v642 = vld [vmem:[%s224 + $0x60] sm:$0xff]
          %v643 = vld [vmem:[%s224 + $0x68] sm:$0xff]
          %v644 = vld [vmem:[%s224 + $0x70] sm:$0xff]
          %v645 = vld [vmem:[%s224 + $0x78] sm:$0xff]
          %v646 = vld [vmem:[%s2] sm:$0x1]
          %v648 = vperm.slane %v646, 0
          %v650 = vadd.f32 %v630, %v648
          %v651 = vadd.f32 %v631, %v648
          %v652 = vadd.f32 %v632, %v648
          %v653 = vadd.f32 %v633, %v648
          %v654 = vadd.f32 %v634, %v648
          %v655 = vadd.f32 %v635, %v648
          %v656 = vadd.f32 %v636, %v648
          %v657 = vadd.f32 %v637, %v648
          %v658 = vadd.f32 %v638, %v648
          %v659 = vadd.f32 %v639, %v648
          %v660 = vadd.f32 %v640, %v648
          %v661 = vadd.f32 %v641, %v648
          %v662 = vadd.f32 %v642, %v648
          %v663 = vadd.f32 %v643, %v648
          %v664 = vadd.f32 %v644, %v648
          %v665 = vadd.f32 %v645, %v648
          %v666 = vmax.f32 %v650, 0.0
          %v667 = vmax.f32 %v651, 0.0
          %v668 = vmax.f32 %v652, 0.0
          %v669 = vmax.f32 %v653, 0.0
          %v670 = vmax.f32 %v654, 0.0
          %v671 = vmax.f32 %v655, 0.0
          %v672 = vmax.f32 %v656, 0.0
          %v673 = vmax.f32 %v657, 0.0
          %v674 = vmax.f32 %v658, 0.0
          %v675 = vmax.f32 %v659, 0.0
          %v676 = vmax.f32 %v660, 0.0
          %v677 = vmax.f32 %v661, 0.0
          %v678 = vmax.f32 %v662, 0.0
          %v679 = vmax.f32 %v663, 0.0
          %v680 = vmax.f32 %v664, 0.0
          %v681 = vmax.f32 %v665, 0.0
          %682 = vst [vmem:[%s224] sm:$0xff] %v666
          %683 = vst [vmem:[%s224 + $0x8] sm:$0xff] %v667
          %684 = vst [vmem:[%s224 + $0x10] sm:$0xff] %v668
          %685 = vst [vmem:[%s224 + $0x18] sm:$0xff] %v669
          %686 = vst [vmem:[%s224 + $0x20] sm:$0xff] %v670
          %687 = vst [vmem:[%s224 + $0x28] sm:$0xff] %v671
          %688 = vst [vmem:[%s224 + $0x30] sm:$0xff] %v672
          %689 = vst [vmem:[%s224 + $0x38] sm:$0xff] %v673
          %690 = vst [vmem:[%s224 + $0x40] sm:$0xff] %v674
          %691 = vst [vmem:[%s224 + $0x48] sm:$0xff] %v675
          %692 = vst [vmem:[%s224 + $0x50] sm:$0xff] %v676
          %693 = vst [vmem:[%s224 + $0x58] sm:$0xff] %v677
          %694 = vst [vmem:[%s224 + $0x60] sm:$0xff] %v678
          %695 = vst [vmem:[%s224 + $0x68] sm:$0xff] %v679
          %696 = vst [vmem:[%s224 + $0x70] sm:$0xff] %v680
          %697 = vst [vmem:[%s224 + $0x78] sm:$0xff] %v681
        $region52: #{tpu_custom_call.1} parent=31 // pred_fallthru
          _
        %s698 = sand.u32 %s111, 1
        %s699 = scalar_lea.sflag [#allocation4], %s698
        %s700 = sand.u32 %s111, 1
        %s701 = smul.addr %s700, 128
        %s702 = scalar_lea.vmem [#allocation7], %s701
        // Predicated region
        $region53: #{tpu_custom_call.1} parent=31 // pred_check
          %p703 = pneg %p121
        $region54: #{tpu_custom_call.1} parent=31 // pred_check_branch
          %705 = sbr.rel (%p703) target = $region56
        $region55: #{tpu_custom_call.1} parent=31 // pred_region
          %s706 = smul.u32 16, %s25
          %708 = vsyncadd %s699, 0
          %s709 = smul.addr %s706, 8
          %s710 = scalar_lea.hbm %s3, %s709
          %s711 = sshll.u32 %s702, 4
          %s712 = int_to_ptr.vmem [resolvable:$true] %s711
          %s713 = sshll.u32 %s710, 4
          %s714 = int_to_ptr.hbm [resolvable:$true] %s713
          %719 = dma.vmem_to_hbm [thread:$0]  %s712, 2048, %s714, %s699, 128, 128, 8
        $region56: #{tpu_custom_call.1} parent=31 // pred_fallthru
          _
      $region32: #{tpu_custom_call.1} parent=5 // pred_fallthru
        _
      %p720 = scmp.le.s32.totalorder 2, %s16
      // Predicated region
      $region57: #{tpu_custom_call.1} parent=5 // pred_check
        %p721 = pneg %p720
      $region58: #{tpu_custom_call.1} parent=5 // pred_check_branch
        %723 = sbr.rel (%p721) target = $region60
      $region59: #{tpu_custom_call.1} parent=5 // pred_region
        %s724 = ssub.s32 %s16, 2
        // Predicated region
        $region61: #{tpu_custom_call.1} parent=59 // pred_check
          %p725 = pneg %p127
        $region62: #{tpu_custom_call.1} parent=59 // pred_check_branch
          %727 = sbr.rel (%p725) target = $region64
        $region63: #{tpu_custom_call.1} parent=59 // pred_region
          %s728 = sand.u32 %s112, 1
          %s729 = scalar_lea.sflag [#allocation4], %s728
          %s730 = sand.u32 %s112, 1
          %s731 = smul.addr %s730, 128
          %s732 = scalar_lea.vmem [#allocation7], %s731
          %734 = dma.done %s729, 2048
        $region64: #{tpu_custom_call.1} parent=59 // pred_fallthru
          _
      $region60: #{tpu_custom_call.1} parent=5 // pred_fallthru
        _
    $region6: #{tpu_custom_call.1} parent=1 // loop_footer
      %s20 = sadd.s32 1, %s16
    $region7: #{tpu_custom_call.1} parent=1 // loop_footer_branch
      %15 = sbr.rel target = $region3
    $region8: #{tpu_custom_call.1} parent=1 // loop_exit
      _
    %735 = vsyncpa [#allocation3], 1
    %s736 = scalar_lea.sflag [#allocation3], 1
    %737 = vsyncpa %s736, 1
    %738 = vsyncpa [#allocation6], 1
    %739 = vsyncpa [#allocation4], 1
    %s740 = scalar_lea.sflag [#allocation4], 1
    %741 = vsyncpa %s740, 1

</llo_original>
